<compile_context>
chip_gen: v5e
topology: v5e:2x2
jax: 0.10.0
libtpu: 0.0.40
codegen_flags: <defaults>
</compile_context>

<pallas_src>
import functools

import jax
import jax.numpy as jnp
from jax.experimental import pallas as pl
from jax.experimental.pallas import tpu as pltpu

LANE = 128
SUBLANE = 8
EPS = 1e-6


def _vmem_limit_bytes() -> int:
    """Generation-aware scoped-VMEM budget.

    ~100 MiB on v5e/v6e (128 MiB physical VMEM), ~48 MiB on v7x (64 MiB per
    TensorCore).  Falls back to a conservative 48 MiB if the trace-time query
    is unavailable in the running JAX version.
    """
    try:
        cap = int(pltpu.get_tpu_info().vmem_capacity_bytes)
    except Exception:  # any failure -> safe default that fits every generation
        cap = 64 * 1024 * 1024
    return (100 if cap >= 128 * 1024 * 1024 else 48) * 1024 * 1024


VMEM_LIMIT = _vmem_limit_bytes()


# -----------------------------------------------------------------------------
# Small shape/padding helpers
# -----------------------------------------------------------------------------
def _round_up(x: int, m: int) -> int:
    return ((x + m - 1) // m) * m


def _pad2d(x, rows: int, cols: int):
    pr, pc = rows - x.shape[0], cols - x.shape[1]
    if pr or pc:
        x = jnp.pad(x, ((0, pr), (0, pc)))
    return x


def _tile_rows(m: int, preferred: int = 256):
    """Pick a sublane-aligned row tile and the padded row count it divides."""
    mp = _round_up(m, SUBLANE)
    tm = min(preferred, mp)
    mp = _round_up(mp, tm)
    return tm, mp


def _pick_lane_tile(padded_dim: int, preferred: int) -> int:
    """padded_dim is a multiple of 128; largest tile <= preferred dividing it."""
    t = min(preferred, padded_dim)
    while padded_dim % t:
        t -= LANE
    return t


# -----------------------------------------------------------------------------
# Kernel 1: fused vision_backbone (patch-embed) + projector (+GELU)
#   grid = (M tiles, projector-N tiles); patch-embed intermediate h lives in a
#   (tm, V) VMEM scratch computed once per M tile (j == 0), so the projector
#   weight can be streamed N-tile by N-tile instead of held (double-buffered)
#   fully resident -- bounds per-step VMEM on v7x at real VLM dims.
# -----------------------------------------------------------------------------
def _vision_fused_kernel(x_ref, w1_ref, b1_ref, w2_ref, b2_ref, o_ref, h_ref):
    j = pl.program_id(1)

    @pl.when(j == 0)
    def _():
        # patch-embed: x @ W1 + b1, f32 accumulation on the MXU, stored bf16
        h = jnp.dot(x_ref[...], w1_ref[...], preferred_element_type=jnp.float32)
        h = h + b1_ref[...].astype(jnp.float32)
        h_ref[...] = h.astype(h_ref.dtype)

    # projector tile: h @ W2[:, jtile] + b2[jtile], GELU epilogue (EUP slot).
    y = jnp.dot(h_ref[...], w2_ref[...], preferred_element_type=jnp.float32)
    y = y + b2_ref[...].astype(jnp.float32)
    # TODO(synk): PyTorch nn.GELU defaults to exact erf; tanh approximation kept
    # here for guaranteed Mosaic lowering across generations.
    y = jax.nn.gelu(y, approximate=True)
    o_ref[...] = y.astype(o_ref.dtype)


def fused_vision_projector(x, w1, b1, w2, b2, *, out_dtype=jnp.bfloat16,
                           tm_pref=256, tn_pref=512):
    """x:[M,K1] bf16, w1:[K1,V] bf16, b1:[1,V] f32, w2:[V,N] bf16, b2:[1,N] f32 -> [M,N].

    The patch-embed -> projector intermediate never touches HBM (kept in VMEM
    scratch); W_proj is streamed over its output axis.
    """
    M, K1 = x.shape
    K1w, V = w1.shape
    Vw, N = w2.shape
    assert K1 == K1w and V == Vw
    assert K1 % LANE == 0 and V % LANE == 0 and N % LANE == 0

    tm, Mp = _tile_rows(M, tm_pref)
    tn = _pick_lane_tile(N, tn_pref)
    xp = _pad2d(x, Mp, K1)
    grid = (Mp // tm, N // tn)

    cost = pl.CostEstimate(
        flops=2 * Mp * (K1 * V + V * N),
        transcendentals=Mp * N,  # GELU tanh
        bytes_accessed=(xp.size * xp.dtype.itemsize
                        + w1.size * w1.dtype.itemsize
                        + (Mp // tm) * w2.size * w2.dtype.itemsize
                        + Mp * N * jnp.dtype(out_dtype).itemsize),
    )

    # TODO(synk): when B*P is tiny (few patches), a second *parallel* axis would
    # keep both v7x TensorCores busy; here the j axis must stay "arbitrary"
    # because the h scratch carries across it.
    out = pl.pallas_call(
        _vision_fused_kernel,
        out_shape=jax.ShapeDtypeStruct((Mp, N), out_dtype),
        grid_spec=pltpu.PrefetchScalarGridSpec(
            num_scalar_prefetch=0,
            grid=grid,
            in_specs=[
                pl.BlockSpec((tm, K1), lambda i, j: (i, 0)),   # patches tile (no re-DMA over j)
                pl.BlockSpec((K1, V), lambda i, j: (0, 0)),    # W_patch (resident, small)
                pl.BlockSpec((1, V), lambda i, j: (0, 0)),     # b_patch
                pl.BlockSpec((V, tn), lambda i, j: (0, j)),    # W_proj N-tile (streamed)
                pl.BlockSpec((1, tn), lambda i, j: (0, j)),    # b_proj N-tile
            ],
            out_specs=pl.BlockSpec((tm, tn), lambda i, j: (i, j)),
            scratch_shapes=[
                pltpu.VMEM((tm, V), jnp.bfloat16),             # patch-embed intermediate h
            ],
        ),
        compiler_params=pltpu.CompilerParams(
            dimension_semantics=("parallel", "arbitrary"),
            vmem_limit_bytes=VMEM_LIMIT,
        ),
        cost_estimate=cost,
    )(xp, w1, b1, w2, b2)
    return out[:M]


# -----------------------------------------------------------------------------
# Kernel 2: fused final RMSNorm + LM head
#   grid = (M tiles, vocab tiles); the FULL hidden dim is resident (tk == K).
#   At j == 0 the row statistic inv = rsqrt(mean(x^2)+eps) is computed once per
#   M tile and the normalized, gamma-scaled bf16 activations are written to a
#   persistent (tm, K) scratch; every vocab tile is then a single MXU matmul.
# -----------------------------------------------------------------------------
def _rmsnorm_lmhead_kernel(x_ref, g_ref, w_ref, b_ref, o_ref, xn_ref,
                           *, hidden_true: int):
    j = pl.program_id(1)

    @pl.when(j == 0)
    def _():
        x = x_ref[...].astype(jnp.float32)
        ssq = jnp.sum(x * x, axis=-1, keepdims=True)
        # Padded M rows have ssq == 0 -> inv = rsqrt(eps) (large but finite);
        # their xn rows are exactly 0 so the result is just the bias and the
        # rows are sliced away by the caller -- benign, do NOT drop EPS.
        inv = jax.lax.rsqrt(ssq / hidden_true + EPS)
        xn_ref[...] = (x * inv * g_ref[...].astype(jnp.float32)).astype(xn_ref.dtype)

    y = jnp.dot(xn_ref[...], w_ref[...], preferred_element_type=jnp.float32)
    o_ref[...] = (y + b_ref[...].astype(jnp.float32)).astype(o_ref.dtype)


def fused_rmsnorm_lmhead(x, gamma, w, b, *, hidden_true, out_dtype=jnp.bfloat16,
                         tm_pref=256, tn_pref=512):
    """logits = rmsnorm(x; gamma, hidden_true) @ w + b.

    x:[M,K] bf16, gamma:[1,K] f32, w:[K,N] bf16, b:[1,N] f32 -> [M,N] out_dtype.
    K/N must be 128-aligned (padded cols of x must be zero).
    """
    M, K = x.shape
    Kw, N = w.shape
    assert K == Kw and gamma.shape == (1, K) and b.shape == (1, N)
    assert K % LANE == 0 and N % LANE == 0

    tm, Mp = _tile_rows(M, tm_pref)
    tn = _pick_lane_tile(N, tn_pref)
    xp = _pad2d(x, Mp, K)
    grid = (Mp // tm, N // tn)

    cost = pl.CostEstimate(
        flops=2 * Mp * N * K,
        transcendentals=Mp,  # one rsqrt per row
        bytes_accessed=(xp.size * xp.dtype.itemsize
                        + (Mp // tm) * w.size * w.dtype.itemsize
                        + Mp * N * jnp.dtype(out_dtype).itemsize),
    )

    # TODO(synk): quantize W_lm (int8 on v5e/v6e, fp8 on v7x) with per-channel
    # scales folded into the bias epilogue to halve the dominant HBM stream.
    # TODO(synk): add pipeline_mode=pl.Buffered(3) on the W_lm BlockSpec if a
    # profile shows exposed DMA on the streamed weight.
    kernel = functools.partial(_rmsnorm_lmhead_kernel, hidden_true=hidden_true)
    out = pl.pallas_call(
        kernel,
        out_shape=jax.ShapeDtypeStruct((Mp, N), out_dtype),
        grid_spec=pltpu.PrefetchScalarGridSpec(
            num_scalar_prefetch=0,
            grid=grid,
            in_specs=[
                pl.BlockSpec((tm, K), lambda i, j: (i, 0)),   # hidden states (DMA'd once per M tile)
                pl.BlockSpec((1, K), lambda i, j: (0, 0)),    # gamma
                pl.BlockSpec((K, tn), lambda i, j: (0, j)),   # W_lm vocab tile (streamed)
                pl.BlockSpec((1, tn), lambda i, j: (0, j)),   # bias vocab tile
            ],
            out_specs=pl.BlockSpec((tm, tn), lambda i, j: (i, j)),
            scratch_shapes=[
                pltpu.VMEM((tm, K), jnp.bfloat16),            # normalized activations (per M tile)
            ],
        ),
        compiler_params=pltpu.CompilerParams(
            # j carries the xn scratch -> must be sequential ("arbitrary");
            # i is sharded across TensorCores ("parallel").
            dimension_semantics=("parallel", "arbitrary"),
            vmem_limit_bytes=VMEM_LIMIT,
        ),
        cost_estimate=cost,
    )(xp, gamma, w, b)
    return out[:M]


# -----------------------------------------------------------------------------
# Concrete VLM forward (synthetic weights; deterministic init)
# -----------------------------------------------------------------------------
class PallasVLM:
    def __init__(self, key, *, in_channels, patch_size, vis_dim, hidden_dim,
                 vocab_size):
        self.patch_size = patch_size
        self.hidden_dim = hidden_dim
        self.vocab_size = vocab_size
        patch_dim = in_channels * patch_size * patch_size

        # 128-lane padded dims; real checkpoints are already 128-aligned, the toy
        # driver dims are padded here so kernel I/O stays lane-dense.
        self.patch_dim_p = _round_up(patch_dim, LANE)
        self.vis_dim_p = _round_up(vis_dim, LANE)
        self.hidden_p = _round_up(hidden_dim, LANE)
        self.vocab_p = _round_up(vocab_size, LANE)

        ks = jax.random.split(key, 4)
        s = 0.02
        # vision_backbone: patch embedding (conv-as-matmul over patches), bf16 weights
        w_patch = s * jax.random.normal(ks[0], (patch_dim, vis_dim))
        self.w_patch = _pad2d(w_patch, self.patch_dim_p, self.vis_dim_p).astype(jnp.bfloat16)
        self.b_patch = jnp.zeros((1, self.vis_dim_p), jnp.float32)
        # projector: vision features -> LLM embedding space (GELU)
        w_proj = s * jax.random.normal(ks[1], (vis_dim, hidden_dim))
        self.w_proj = _pad2d(w_proj, self.vis_dim_p, self.hidden_p).astype(jnp.bfloat16)
        self.b_proj = jnp.zeros((1, self.hidden_p), jnp.float32)
        # llm_backbone: token embedding table + final RMSNorm + LM head
        tok = s * jax.random.normal(ks[2], (vocab_size, hidden_dim))
        self.tok_emb = _pad2d(tok, vocab_size, self.hidden_p).astype(jnp.bfloat16)
        self.norm_g = _pad2d(jnp.ones((1, hidden_dim), jnp.float32), 1, self.hidden_p)
        w_lm = s * jax.random.normal(ks[3], (hidden_dim, vocab_size))
        self.w_lm = _pad2d(w_lm, self.hidden_p, self.vocab_p).astype(jnp.bfloat16)
        self.b_lm = jnp.zeros((1, self.vocab_p), jnp.float32)

    def forward(self, input_ids, pixel_values):
        """input_ids: [B, S] int32; pixel_values: [B, C, H, W] f32 (NCHW).

        Returns logits [B, num_patches + S, vocab] (CausalLMOutputWithPast.logits).
        """
        B, C, H, W = pixel_values.shape
        p = self.patch_size
        nH, nW = H // p, W // p
        P = nH * nW

        # --- patchify (glue): NCHW -> [B*P, C*p*p], lane-padded, bf16 ---
        patches = pixel_values.reshape(B, C, nH, p, nW, p)
        patches = patches.transpose(0, 2, 4, 1, 3, 5).reshape(B * P, C * p * p)
        patches = _pad2d(patches, B * P, self.patch_dim_p).astype(jnp.bfloat16)

        # --- fused vision_backbone + projector (Pallas, GELU epilogue) ---
        vis_tok = fused_vision_projector(patches, self.w_patch, self.b_patch,
                                         self.w_proj, self.b_proj)       # [B*P, hidden_p] bf16
        vis_tok = vis_tok.reshape(B, P, self.hidden_p)

        # --- text embeddings (gather stays in JAX glue; table already hidden-padded) ---
        txt_tok = jnp.take(self.tok_emb, input_ids, axis=0)              # [B, S, hidden_p] bf16

        # --- multimodal fusion: prepend visual tokens ---
        # TODO(synk): at real sequence lengths, write visual/text rows directly into one
        # preallocated [B, P+S, D] buffer (input_output_aliases) instead of concatenate.
        fused = jnp.concatenate([vis_tok, txt_tok], axis=1)              # [B, P+S, hidden_p]
        T = P + input_ids.shape[1]
        fused2d = fused.reshape(B * T, self.hidden_p)

        # --- llm_backbone final RMSNorm fused into the LM head (Pallas, tiled) ---
        # TODO(synk): full decoder layers (attention + past_key_values KV cache) are out
        # of scope for this synthetic base-class kernel.
        logits = fused_rmsnorm_lmhead(fused2d, self.norm_g, self.w_lm, self.b_lm,
                                      hidden_true=self.hidden_dim)       # [B*T, vocab_p] bf16
        return logits[:, : self.vocab_size].reshape(B, T, self.vocab_size)


# -----------------------------------------------------------------------------
# Pure-JAX reference (mirrors the kernel's bf16 casting points)
# -----------------------------------------------------------------------------
def _reference_forward(model, input_ids, pixel_values):
    B, C, H, W = pixel_values.shape
    p = model.patch_size
    nH, nW = H // p, W // p
    P = nH * nW
    patches = pixel_values.reshape(B, C, nH, p, nW, p)
    patches = patches.transpose(0, 2, 4, 1, 3, 5).reshape(B * P, C * p * p)
    patches = _pad2d(patches, B * P, model.patch_dim_p).astype(jnp.bfloat16)

    h = jnp.dot(patches, model.w_patch, preferred_element_type=jnp.float32) + model.b_patch
    h = h.astype(jnp.bfloat16)
    y = jnp.dot(h, model.w_proj, preferred_element_type=jnp.float32) + model.b_proj
    vis = jax.nn.gelu(y, approximate=True).astype(jnp.bfloat16).reshape(B, P, model.hidden_p)

    txt = jnp.take(model.tok_emb, input_ids, axis=0)
    T = P + input_ids.shape[1]
    fused = jnp.concatenate([vis, txt], axis=1).reshape(B * T, model.hidden_p)

    x = fused.astype(jnp.float32)
    ssq = jnp.sum(x * x, axis=-1, keepdims=True)
    inv = jax.lax.rsqrt(ssq / model.hidden_dim + EPS)
    xn = (x * inv * model.norm_g).astype(jnp.bfloat16)
    logits = jnp.dot(xn, model.w_lm, preferred_element_type=jnp.float32) + model.b_lm
    return logits[:, : model.vocab_size].reshape(B, T, model.vocab_size)


# -----------------------------------------------------------------------------
# Driver
# -----------------------------------------------------------------------------
if __name__ == "__main__":
    key = jax.random.PRNGKey(0)
    k_model, k_ids, k_pix = jax.random.split(key, 3)

    B, C, Himg, Wimg = 2, 4, 16, 16
    S = 8
    VOCAB = 64
    HIDDEN = 32
    VIS_DIM = 32
    PATCH = 8  # -> 4 visual tokens per image

    model = PallasVLM(k_model, in_channels=C, patch_size=PATCH,
                      vis_dim=VIS_DIM, hidden_dim=HIDDEN, vocab_size=VOCAB)

    input_ids = jax.random.randint(k_ids, (B, S), 0, VOCAB, dtype=jnp.int32)
    pixel_values = jax.random.normal(k_pix, (B, C, Himg, Wimg), dtype=jnp.float32)

    logits = jax.jit(model.forward)(input_ids, pixel_values)
    jax.block_until_ready(logits)

    num_patches = (Himg // PATCH) * (Wimg // PATCH)
    assert logits.shape == (B, num_patches + S, VOCAB), logits.shape
    assert bool(jnp.all(jnp.isfinite(logits.astype(jnp.float32))))

    ref = _reference_forward(model, input_ids, pixel_values)
    assert jnp.allclose(logits.astype(jnp.float32), ref, atol=2e-2, rtol=2e-2), \
        float(jnp.max(jnp.abs(logits.astype(jnp.float32) - ref)))

    print("KERNEL_OK")
</pallas_src>

<mosaic_0001>
module attributes {stable_mosaic.version = 11 : i64} {
  func.func @_vision_fused_kernel(%arg0: i32, %arg1: i32, %arg2: memref<8x256xbf16, #tpu.memory_space<vmem>>, %arg3: memref<256x128xbf16, #tpu.memory_space<vmem>>, %arg4: memref<1x128xf32, #tpu.memory_space<vmem>>, %arg5: memref<128x128xbf16, #tpu.memory_space<vmem>>, %arg6: memref<1x128xf32, #tpu.memory_space<vmem>>, %arg7: memref<8x128xbf16, #tpu.memory_space<vmem>>, %arg8: memref<8x128xbf16, #tpu.memory_space<vmem>>) attributes {dimension_semantics = [#tpu.dimension_semantics<parallel>, #tpu.dimension_semantics<arbitrary>], iteration_bounds = array<i64: 1, 1>, scalar_prefetch = 0 : i64, scratch_operands = 1 : i64, tpu.core_type = #tpu.core_type<tc>, window_params = [{transform_indices = @transform_0, window_bounds = array<i64: 8, 256>}, {pipeline_mode = #tpu.pipeline_mode<synchronous>, transform_indices = @transform_1, window_bounds = array<i64: 256, 128>}, {pipeline_mode = #tpu.pipeline_mode<synchronous>, transform_indices = @transform_2, window_bounds = array<i64: 1, 128>}, {transform_indices = @transform_3, window_bounds = array<i64: 128, 128>}, {transform_indices = @transform_4, window_bounds = array<i64: 1, 128>}, {transform_indices = @transform_5, window_bounds = array<i64: 8, 128>}]} {
    %c0_i32 = arith.constant 0 : i32
    %0 = arith.cmpi eq, %arg1, %c0_i32 : i32
    %1 = arith.extui %0 : i1 to i32
    %c0_i32_0 = arith.constant 0 : i32
    %2 = arith.cmpi ne, %1, %c0_i32_0 : i32
    scf.if %2 {
      %c0_12 = arith.constant 0 : index
      %c0_13 = arith.constant 0 : index
      %24 = vector.load %arg2[%c0_12, %c0_13] : memref<8x256xbf16, #tpu.memory_space<vmem>>, vector<8x256xbf16>
      %c0_14 = arith.constant 0 : index
      %c0_15 = arith.constant 0 : index
      %25 = vector.load %arg3[%c0_14, %c0_15] : memref<256x128xbf16, #tpu.memory_space<vmem>>, vector<256x128xbf16>
      %cst_16 = arith.constant dense<0.000000e+00> : vector<8x128xf32>
      %26 = tpu.matmul %24, %25, %cst_16 {dimension_numbers = #tpu.dot_dimension_numbers<[1], [0], [0], [1], [0, 0, 1, 1], [], []>} : vector<8x256xbf16>, vector<256x128xbf16>, vector<8x128xf32> -> vector<8x128xf32>
      %c0_17 = arith.constant 0 : index
      %c0_18 = arith.constant 0 : index
      %27 = vector.load %arg4[%c0_17, %c0_18] : memref<1x128xf32, #tpu.memory_space<vmem>>, vector<1x128xf32>
      %28 = vector.broadcast %27 : vector<1x128xf32> to vector<8x128xf32>
      %29 = arith.addf %26, %28 : vector<8x128xf32>
      %30 = arith.truncf %29 : vector<8x128xf32> to vector<8x128xbf16>
      %c0_19 = arith.constant 0 : index
      %c0_20 = arith.constant 0 : index
      %31 = vector.load %arg8[%c0_19, %c0_20] : memref<8x128xbf16, #tpu.memory_space<vmem>>, vector<8x128xbf16>
      tpu.vector_store %arg8[%c0_19, %c0_20], %30 {strides = array<i32>} : memref<8x128xbf16, #tpu.memory_space<vmem>>, vector<8x128xbf16>,
    } else {
    }
    %c0 = arith.constant 0 : index
    %c0_1 = arith.constant 0 : index
    %3 = vector.load %arg8[%c0, %c0_1] : memref<8x128xbf16, #tpu.memory_space<vmem>>, vector<8x128xbf16>
    %c0_2 = arith.constant 0 : index
    %c0_3 = arith.constant 0 : index
    %4 = vector.load %arg5[%c0_2, %c0_3] : memref<128x128xbf16, #tpu.memory_space<vmem>>, vector<128x128xbf16>
    %cst = arith.constant dense<0.000000e+00> : vector<8x128xf32>
    %5 = tpu.matmul %3, %4, %cst {dimension_numbers = #tpu.dot_dimension_numbers<[1], [0], [0], [1], [0, 0, 1, 1], [], []>} : vector<8x128xbf16>, vector<128x128xbf16>, vector<8x128xf32> -> vector<8x128xf32>
    %c0_4 = arith.constant 0 : index
    %c0_5 = arith.constant 0 : index
    %6 = vector.load %arg6[%c0_4, %c0_5] : memref<1x128xf32, #tpu.memory_space<vmem>>, vector<1x128xf32>
    %7 = vector.broadcast %6 : vector<1x128xf32> to vector<8x128xf32>
    %8 = arith.addf %5, %7 : vector<8x128xf32>
    %9 = arith.mulf %8, %8 : vector<8x128xf32>
    %10 = arith.mulf %8, %9 : vector<8x128xf32>
    %cst_6 = arith.constant 4.471500e-02 : f32
    %11 = vector.broadcast %cst_6 : f32 to vector<8x128xf32>
    %12 = arith.mulf %11, %10 : vector<8x128xf32>
    %13 = arith.addf %8, %12 : vector<8x128xf32>
    %cst_7 = arith.constant 0.797884583 : f32
    %14 = vector.broadcast %cst_7 : f32 to vector<8x128xf32>
    %15 = arith.mulf %14, %13 : vector<8x128xf32>
    %16 = math.tanh %15 : vector<8x128xf32>
    %cst_8 = arith.constant 1.000000e+00 : f32
    %17 = vector.broadcast %cst_8 : f32 to vector<8x128xf32>
    %18 = arith.addf %17, %16 : vector<8x128xf32>
    %cst_9 = arith.constant 5.000000e-01 : f32
    %19 = vector.broadcast %cst_9 : f32 to vector<8x128xf32>
    %20 = arith.mulf %19, %18 : vector<8x128xf32>
    %21 = arith.mulf %8, %20 : vector<8x128xf32>
    %22 = arith.truncf %21 : vector<8x128xf32> to vector<8x128xbf16>
    %c0_10 = arith.constant 0 : index
    %c0_11 = arith.constant 0 : index
    %23 = vector.load %arg7[%c0_10, %c0_11] : memref<8x128xbf16, #tpu.memory_space<vmem>>, vector<8x128xbf16>
    tpu.vector_store %arg7[%c0_10, %c0_11], %22 {strides = array<i32>} : memref<8x128xbf16, #tpu.memory_space<vmem>>, vector<8x128xbf16>,
    return
  }
  func.func @transform_0(%arg0: i32, %arg1: i32) -> (i32, i32) {
    %c0_i32 = arith.constant 0 : i32
    %c0_i32_0 = arith.constant 0 : i32
    return %arg0, %c0_i32 : i32, i32
  }
  func.func @transform_1(%arg0: i32, %arg1: i32) -> (i32, i32) {
    %c0_i32 = arith.constant 0 : i32
    %c0_i32_0 = arith.constant 0 : i32
    %c0_i32_1 = arith.constant 0 : i32
    return %c0_i32, %c0_i32_0 : i32, i32
  }
  func.func @transform_2(%arg0: i32, %arg1: i32) -> (i32, i32) {
    %c0_i32 = arith.constant 0 : i32
    %c0_i32_0 = arith.constant 0 : i32
    %c0_i32_1 = arith.constant 0 : i32
    return %c0_i32, %c0_i32_0 : i32, i32
  }
  func.func @transform_3(%arg0: i32, %arg1: i32) -> (i32, i32) {
    %c0_i32 = arith.constant 0 : i32
    %c0_i32_0 = arith.constant 0 : i32
    return %c0_i32, %arg1 : i32, i32
  }
  func.func @transform_4(%arg0: i32, %arg1: i32) -> (i32, i32) {
    %c0_i32 = arith.constant 0 : i32
    %c0_i32_0 = arith.constant 0 : i32
    return %c0_i32, %arg1 : i32, i32
  }
  func.func @transform_5(%arg0: i32, %arg1: i32) -> (i32, i32) {
    %c0_i32 = arith.constant 0 : i32
    return %arg0, %arg1 : i32, i32
  }
}

module attributes {stable_mosaic.version = 11 : i64} {
  func.func @_rmsnorm_lmhead_kernel(%arg0: i32, %arg1: i32, %arg2: memref<24x128xbf16, #tpu.memory_space<vmem>>, %arg3: memref<1x128xf32, #tpu.memory_space<vmem>>, %arg4: memref<128x128xbf16, #tpu.memory_space<vmem>>, %arg5: memref<1x128xf32, #tpu.memory_space<vmem>>, %arg6: memref<24x128xbf16, #tpu.memory_space<vmem>>, %arg7: memref<24x128xbf16, #tpu.memory_space<vmem>>) attributes {dimension_semantics = [#tpu.dimension_semantics<parallel>, #tpu.dimension_semantics<arbitrary>], iteration_bounds = array<i64: 1, 1>, scalar_prefetch = 0 : i64, scratch_operands = 1 : i64, tpu.core_type = #tpu.core_type<tc>, window_params = [{transform_indices = @transform_0, window_bounds = array<i64: 24, 128>}, {pipeline_mode = #tpu.pipeline_mode<synchronous>, transform_indices = @transform_1, window_bounds = array<i64: 1, 128>}, {transform_indices = @transform_2, window_bounds = array<i64: 128, 128>}, {transform_indices = @transform_3, window_bounds = array<i64: 1, 128>}, {transform_indices = @transform_4, window_bounds = array<i64: 24, 128>}]} {
    %c0_i32 = arith.constant 0 : i32
    %0 = arith.cmpi eq, %arg1, %c0_i32 : i32
    %1 = arith.extui %0 : i1 to i32
    %c0_i32_0 = arith.constant 0 : i32
    %2 = arith.cmpi ne, %1, %c0_i32_0 : i32
    scf.if %2 {
      %c0_8 = arith.constant 0 : index
      %c0_9 = arith.constant 0 : index
      %11 = vector.load %arg2[%c0_8, %c0_9] : memref<24x128xbf16, #tpu.memory_space<vmem>>, vector<24x128xbf16>
      %12 = arith.extf %11 : vector<24x128xbf16> to vector<24x128xf32>
      %13 = arith.mulf %12, %12 : vector<24x128xf32>
      %cst_10 = arith.constant dense<0.000000e+00> : vector<24xf32>
      %14 = vector.multi_reduction <add>, %13, %cst_10 [1] : vector<24x128xf32> to vector<24xf32>
      %15 = vector.shape_cast %14 : vector<24xf32> to vector<24x1xf32>
      %cst_11 = arith.constant 3.200000e+01 : f32
      %16 = vector.broadcast %cst_11 : f32 to vector<24x1xf32>
      %17 = arith.divf %15, %16 : vector<24x1xf32>
      %cst_12 = arith.constant 9.99999997E-7 : f32
      %18 = vector.broadcast %cst_12 : f32 to vector<24x1xf32>
      %19 = arith.addf %17, %18 : vector<24x1xf32>
      %20 = math.rsqrt %19 : vector<24x1xf32>
      %21 = vector.broadcast %20 : vector<24x1xf32> to vector<24x128xf32>
      %22 = arith.mulf %12, %21 : vector<24x128xf32>
      %c0_13 = arith.constant 0 : index
      %c0_14 = arith.constant 0 : index
      %23 = vector.load %arg3[%c0_13, %c0_14] : memref<1x128xf32, #tpu.memory_space<vmem>>, vector<1x128xf32>
      %24 = vector.broadcast %23 : vector<1x128xf32> to vector<24x128xf32>
      %25 = arith.mulf %22, %24 : vector<24x128xf32>
      %26 = arith.truncf %25 : vector<24x128xf32> to vector<24x128xbf16>
      %c0_15 = arith.constant 0 : index
      %c0_16 = arith.constant 0 : index
      %27 = vector.load %arg7[%c0_15, %c0_16] : memref<24x128xbf16, #tpu.memory_space<vmem>>, vector<24x128xbf16>
      tpu.vector_store %arg7[%c0_15, %c0_16], %26 {strides = array<i32>} : memref<24x128xbf16, #tpu.memory_space<vmem>>, vector<24x128xbf16>,
    } else {
    }
    %c0 = arith.constant 0 : index
    %c0_1 = arith.constant 0 : index
    %3 = vector.load %arg7[%c0, %c0_1] : memref<24x128xbf16, #tpu.memory_space<vmem>>, vector<24x128xbf16>
    %c0_2 = arith.constant 0 : index
    %c0_3 = arith.constant 0 : index
    %4 = vector.load %arg4[%c0_2, %c0_3] : memref<128x128xbf16, #tpu.memory_space<vmem>>, vector<128x128xbf16>
    %cst = arith.constant dense<0.000000e+00> : vector<24x128xf32>
    %5 = tpu.matmul %3, %4, %cst {dimension_numbers = #tpu.dot_dimension_numbers<[1], [0], [0], [1], [0, 0, 1, 1], [], []>} : vector<24x128xbf16>, vector<128x128xbf16>, vector<24x128xf32> -> vector<24x128xf32>
    %c0_4 = arith.constant 0 : index
    %c0_5 = arith.constant 0 : index
    %6 = vector.load %arg5[%c0_4, %c0_5] : memref<1x128xf32, #tpu.memory_space<vmem>>, vector<1x128xf32>
    %7 = vector.broadcast %6 : vector<1x128xf32> to vector<24x128xf32>
    %8 = arith.addf %5, %7 : vector<24x128xf32>
    %9 = arith.truncf %8 : vector<24x128xf32> to vector<24x128xbf16>
    %c0_6 = arith.constant 0 : index
    %c0_7 = arith.constant 0 : index
    %10 = vector.load %arg6[%c0_6, %c0_7] : memref<24x128xbf16, #tpu.memory_space<vmem>>, vector<24x128xbf16>
    tpu.vector_store %arg6[%c0_6, %c0_7], %9 {strides = array<i32>} : memref<24x128xbf16, #tpu.memory_space<vmem>>, vector<24x128xbf16>,
    return
  }
  func.func @transform_0(%arg0: i32, %arg1: i32) -> (i32, i32) {
    %c0_i32 = arith.constant 0 : i32
    %c0_i32_0 = arith.constant 0 : i32
    return %arg0, %c0_i32 : i32, i32
  }
  func.func @transform_1(%arg0: i32, %arg1: i32) -> (i32, i32) {
    %c0_i32 = arith.constant 0 : i32
    %c0_i32_0 = arith.constant 0 : i32
    %c0_i32_1 = arith.constant 0 : i32
    return %c0_i32, %c0_i32_0 : i32, i32
  }
  func.func @transform_2(%arg0: i32, %arg1: i32) -> (i32, i32) {
    %c0_i32 = arith.constant 0 : i32
    %c0_i32_0 = arith.constant 0 : i32
    return %c0_i32, %arg1 : i32, i32
  }
  func.func @transform_3(%arg0: i32, %arg1: i32) -> (i32, i32) {
    %c0_i32 = arith.constant 0 : i32
    %c0_i32_0 = arith.constant 0 : i32
    return %c0_i32, %arg1 : i32, i32
  }
  func.func @transform_4(%arg0: i32, %arg1: i32) -> (i32, i32) {
    %c0_i32 = arith.constant 0 : i32
    return %arg0, %arg1 : i32, i32
  }
}

</mosaic_0001>

<llo_original>
// kernel: forward.3
$region0: #{forward.3}
  #allocation0 [shape = 'u32[]', space=smem, size = 0x4, offset = 0x4, fixed_abs, tag = 'smem constant byte address 0x4 - core index']
  #allocation1 [shape = 'u32[72,128]{1,0:T(1,128)}', space=vmem, size = 0x9000, scoped, tag = 'internal scratch']
  #allocation2 [shape = 'bf16[24,128]{1,0:T(8,128)(2,1)}', space=vmem, size = 0x1800, scoped, tag = 'scratch operand']
  %s0 = inlined_call_operand.vmem [shape: bf16[24,128], index: 0, kind: input, shape index: {}]
  %s1 = inlined_call_operand.vmem [shape: f32[1,128], index: 1, kind: input, shape index: {}]
  %s2 = inlined_call_operand.vmem [shape: bf16[128,128], index: 2, kind: input, shape index: {}]
  %s3 = inlined_call_operand.vmem [shape: f32[1,128], index: 3, kind: input, shape index: {}]
  %s4 = inlined_call_operand.vmem [shape: bf16[24,128], index: 4, kind: output, shape index: {}]
  %s5 = sld [smem:[#allocation0]]
  $region30: #{forward.3} parent=0
    _
  %s7 = ssub.s32 1, %s5
  %s8 = scalar_select 0, %s7, %s5
  // Predicated region
  $region2: #{forward.3} parent=0 // pred_check
    _
  $region3: #{forward.3} parent=0 // pred_check_branch
    %10 = sbr.rel (0) target = $region5
  $region4: #{forward.3} parent=0 // pred_region
    _
  $region5: #{forward.3} parent=0 // pred_fallthru
    _
  // Predicated region
  $region6: #{forward.3} parent=0 // pred_check
    _
  $region7: #{forward.3} parent=0 // pred_check_branch
    %12 = sbr.rel (0) target = $region9
  $region8: #{forward.3} parent=0 // pred_region
    _
  $region9: #{forward.3} parent=0 // pred_fallthru
    _
  // Predicated region
  $region10: #{forward.3} parent=0 // pred_check
    _
  $region11: #{forward.3} parent=0 // pred_check_branch
    %14 = sbr.rel (0) target = $region13
  $region12: #{forward.3} parent=0 // pred_region
    _
  $region13: #{forward.3} parent=0 // pred_fallthru
    _
  // Predicated region
  $region14: #{forward.3} parent=0 // pred_check
    _
  $region15: #{forward.3} parent=0 // pred_check_branch
    %16 = sbr.rel (0) target = $region17
  $region16: #{forward.3} parent=0 // pred_region
    _
  $region17: #{forward.3} parent=0 // pred_fallthru
    _
  %p17 = scmp.eq.s32.totalorder 0, 0
  // Predicated region
  $region18: #{forward.3} parent=0 // pred_check
    %p18 = pneg %p17
  $region19: #{forward.3} parent=0 // pred_check_branch
    %20 = sbr.rel (%p18) target = $region21
  $region20: #{forward.3} parent=0 // pred_region
    %v21 = vld [vmem:[%s0] sm:$0xf]
    %v22 = vld [vmem:[%s0 + $0x4] sm:$0xf]
    %v23 = vld [vmem:[%s0 + $0x8] sm:$0xf]
    %v24 = vunpack.c.l.bf16 %v21
    %v25 = vunpack.c.l.bf16 %v22
    %v26 = vunpack.c.l.bf16 %v23
    %v27 = vmul.f32 %v24, %v24
    %v28 = vmul.f32 %v25, %v25
    %v29 = vmul.f32 %v26, %v26
    %30 = vadd.xlane.f32.xlu0 %v27
    %v31 = vpop.xlane.xlu0 %30
    %32 = vadd.xlane.f32.xlu0 %v28
    %v33 = vpop.xlane.xlu0 %32
    %34 = vadd.xlane.f32.xlu0 %v29
    %v35 = vpop.xlane.xlu0 %34
    %v36 = vrcp.pop 32.0
    %v37 = vmul.f32 32.0, %v36
    %v38 = vsub.f32 1.0, %v37
    %v39 = vmul.f32 %v36, %v38
    %v40 = vadd.f32 %v36, %v39
    %vm41 = vweird.f32 %v36
    %v42 = vsel %vm41, %v36, %v40
    %v43 = vmul.f32 %v31, %v42
    %v44 = vmul.f32 %v33, %v42
    %v45 = vmul.f32 %v35, %v42
    %v46 = vadd.f32 %v43, 1e-06
    %v47 = vadd.f32 %v44, 1e-06
    %v48 = vadd.f32 %v45, 1e-06
    %v49 = vrsqrt.pop %v46
    %v50 = vmul.f32 %v49, %v46
    %v51 = vmul.f32 %v50, %v49
    %v52 = vmul.f32 0.5, %v51
    %v53 = vsub.f32 1.5, %v52
    %v54 = vmul.f32 %v49, %v53
    %vm55 = vweird.f32 %v46
    %vm56 = vweird.f32 %v49
    %vm57 = vmor %vm55, %vm56
    %v58 = vsel %vm57, %v49, %v54
    %v59 = vrsqrt.pop %v47
    %v60 = vmul.f32 %v59, %v47
    %v61 = vmul.f32 %v60, %v59
    %v62 = vmul.f32 0.5, %v61
    %v63 = vsub.f32 1.5, %v62
    %v64 = vmul.f32 %v59, %v63
    %vm65 = vweird.f32 %v47
    %vm66 = vweird.f32 %v59
    %vm67 = vmor %vm65, %vm66
    %v68 = vsel %vm67, %v59, %v64
    %v69 = vrsqrt.pop %v48
    %v70 = vmul.f32 %v69, %v48
    %v71 = vmul.f32 %v70, %v69
    %v72 = vmul.f32 0.5, %v71
    %v73 = vsub.f32 1.5, %v72
    %v74 = vmul.f32 %v69, %v73
    %vm75 = vweird.f32 %v48
    %vm76 = vweird.f32 %v69
    %vm77 = vmor %vm75, %vm76
    %v78 = vsel %vm77, %v69, %v74
    %v79 = vmul.f32 %v24, %v58
    %v80 = vmul.f32 %v25, %v68
    %v81 = vmul.f32 %v26, %v78
    %v82 = vld [vmem:[%s1] sm:$0x1]
    %v84 = vperm.slane %v82, 0
    %v86 = vmul.f32 %v79, %v84
    %v87 = vmul.f32 %v80, %v84
    %v88 = vmul.f32 %v81, %v84
    %v89 = vpack.c.bf16 %v86, %v86
    %v90 = vpack.c.bf16 %v87, %v87
    %v91 = vpack.c.bf16 %v88, %v88
    %92 = vst [vmem:[#allocation2] sm:$0xf] %v89
    %93 = vst [vmem:[#allocation2 + $0x4] sm:$0xf] %v90
    %94 = vst [vmem:[#allocation2 + $0x8] sm:$0xf] %v91
  $region21: #{forward.3} parent=0 // pred_fallthru
    _
  %v95 = vld [vmem:[#allocation2] sm:$0xf]
  %v96 = vld [vmem:[#allocation2 + $0x4] sm:$0xf]
  %v97 = vld [vmem:[#allocation2 + $0x8] sm:$0xf]
  %v98 = vld [vmem:[%s2] sm:$0xf]
  %v99 = vld [vmem:[%s2 + $0x4] sm:$0xf]
  %v100 = vld [vmem:[%s2 + $0x8] sm:$0xf]
  %v101 = vld [vmem:[%s2 + $0xc] sm:$0xf]
  %v102 = vld [vmem:[%s2 + $0x10] sm:$0xf]
  %v103 = vld [vmem:[%s2 + $0x14] sm:$0xf]
  %v104 = vld [vmem:[%s2 + $0x18] sm:$0xf]
  %v105 = vld [vmem:[%s2 + $0x1c] sm:$0xf]
  %v106 = vld [vmem:[%s2 + $0x20] sm:$0xf]
  %v107 = vld [vmem:[%s2 + $0x24] sm:$0xf]
  %v108 = vld [vmem:[%s2 + $0x28] sm:$0xf]
  %v109 = vld [vmem:[%s2 + $0x2c] sm:$0xf]
  %v110 = vld [vmem:[%s2 + $0x30] sm:$0xf]
  %v111 = vld [vmem:[%s2 + $0x34] sm:$0xf]
  %v112 = vld [vmem:[%s2 + $0x38] sm:$0xf]
  %v113 = vld [vmem:[%s2 + $0x3c] sm:$0xf]
  %v114 = vld [vmem:[%s3] sm:$0x1]
  %v116 = vperm.slane %v114, 0
  %v121 = vunpack.c.l.b16 %v95
  %v122 = vunpack.c.l.b16 %v96
  %v123 = vunpack.c.l.b16 %v97
  %v124 = vpack.c.b16 %v122, %v121
  %v125 = vpack.c.b16 %v123, %v123
  %v144 = vunpack.c.l.b16 %v98
  %v145 = vunpack.c.l.b16 %v99
  %v146 = vunpack.c.l.b16 %v100
  %v147 = vunpack.c.l.b16 %v101
  %v148 = vunpack.c.l.b16 %v102
  %v149 = vunpack.c.l.b16 %v103
  %v150 = vunpack.c.l.b16 %v104
  %v151 = vunpack.c.l.b16 %v105
  %v152 = vunpack.c.l.b16 %v106
  %v153 = vunpack.c.l.b16 %v107
  %v154 = vunpack.c.l.b16 %v108
  %v155 = vunpack.c.l.b16 %v109
  %v156 = vunpack.c.l.b16 %v110
  %v157 = vunpack.c.l.b16 %v111
  %v158 = vunpack.c.l.b16 %v112
  %v159 = vunpack.c.l.b16 %v113
  %v160 = vpack.c.b16 %v145, %v144
  %v161 = vpack.c.b16 %v147, %v146
  %v162 = vpack.c.b16 %v149, %v148
  %v163 = vpack.c.b16 %v151, %v150
  %v164 = vpack.c.b16 %v153, %v152
  %v165 = vpack.c.b16 %v155, %v154
  %v166 = vpack.c.b16 %v157, %v156
  %v167 = vpack.c.b16 %v159, %v158
  %176 = vmatpush.bf16.msra.mxu0 %v167
  %177 = vmatpush.bf16.msra.mxu0 %v166
  %178 = vmatpush.bf16.msra.mxu0 %v165
  %179 = vmatpush.bf16.msra.mxu0 %v164
  %180 = vmatpush.bf16.msra.mxu0 %v163
  %181 = vmatpush.bf16.msra.mxu0 %v162
  %182 = vmatpush.bf16.msra.mxu0 %v161
  %183 = vmatpush.bf16.msra.mxu0 %v160
  %184 = vmatmul.bf16.gmra.mxu0 %v124
  %v185 = vpop.f32.mrf.mxu0
  %v186 = vadd.f32 %v116, %v185
  %v187 = vpop.f32.mrf.mxu0
  %v188 = vadd.f32 %v116, %v187
  %189 = vmatmul.bf16.gmra.mxu0 %v125
  %v190 = vpop.f32.mrf.mxu0
  %v191 = vadd.f32 %v116, %v190
  %v192 = vpop.f32.mrf.mxu0
  %193 = vdwg.mxu0
  %v194 = vpack.c.bf16 %v186, %v186
  %v195 = vpack.c.bf16 %v188, %v188
  %v196 = vpack.c.bf16 %v191, %v191
  %197 = vst [vmem:[%s4] sm:$0xf] %v194
  %198 = vst [vmem:[%s4 + $0x4] sm:$0xf] %v195
  %199 = vst [vmem:[%s4 + $0x8] sm:$0xf] %v196
  // Predicated region
  $region22: #{forward.3} parent=0 // pred_check
    _
  $region23: #{forward.3} parent=0 // pred_check_branch
    %201 = sbr.rel (0) target = $region25
  $region24: #{forward.3} parent=0 // pred_region
    _
  $region25: #{forward.3} parent=0 // pred_fallthru
    _
  // Predicated region
  $region26: #{forward.3} parent=0 // pred_check
    _
  $region27: #{forward.3} parent=0 // pred_check_branch
    %203 = sbr.rel (0) target = $region29
  $region28: #{forward.3} parent=0 // pred_region
    _
  $region29: #{forward.3} parent=0 // pred_fallthru
    _

// kernel: forward.2
$region0: #{forward.2}
  #allocation0 [shape = 'u32[]', space=smem, size = 0x4, offset = 0x4, fixed_abs, tag = 'smem constant byte address 0x4 - core index']
  #allocation1 [shape = 'u32[72,128]{1,0:T(1,128)}', space=vmem, size = 0x9000, scoped, tag = 'internal scratch']
  #allocation2 [shape = 'bf16[8,128]{1,0:T(8,128)(2,1)}', space=vmem, size = 0x800, scoped, tag = 'scratch operand']
  %s0 = inlined_call_operand.vmem [shape: bf16[8,256], index: 0, kind: input, shape index: {}]
  %s1 = inlined_call_operand.vmem [shape: bf16[256,128], index: 1, kind: input, shape index: {}]
  %s2 = inlined_call_operand.vmem [shape: f32[1,128], index: 2, kind: input, shape index: {}, may-alias: {2,4}]
  %s3 = inlined_call_operand.vmem [shape: bf16[128,128], index: 3, kind: input, shape index: {}]
  %s4 = inlined_call_operand.vmem [shape: f32[1,128], index: 4, kind: input, shape index: {}, may-alias: {2,4}]
  %s5 = inlined_call_operand.vmem [shape: bf16[8,128], index: 5, kind: output, shape index: {}]
  %s6 = sld [smem:[#allocation0]]
  $region34: #{forward.2} parent=0
    _
  %s8 = ssub.s32 1, %s6
  %s9 = scalar_select 0, %s8, %s6
  // Predicated region
  $region2: #{forward.2} parent=0 // pred_check
    _
  $region3: #{forward.2} parent=0 // pred_check_branch
    %11 = sbr.rel (0) target = $region5
  $region4: #{forward.2} parent=0 // pred_region
    _
  $region5: #{forward.2} parent=0 // pred_fallthru
    _
  // Predicated region
  $region6: #{forward.2} parent=0 // pred_check
    _
  $region7: #{forward.2} parent=0 // pred_check_branch
    %13 = sbr.rel (0) target = $region9
  $region8: #{forward.2} parent=0 // pred_region
    _
  $region9: #{forward.2} parent=0 // pred_fallthru
    _
  // Predicated region
  $region10: #{forward.2} parent=0 // pred_check
    _
  $region11: #{forward.2} parent=0 // pred_check_branch
    %15 = sbr.rel (0) target = $region13
  $region12: #{forward.2} parent=0 // pred_region
    _
  $region13: #{forward.2} parent=0 // pred_fallthru
    _
  // Predicated region
  $region14: #{forward.2} parent=0 // pred_check
    _
  $region15: #{forward.2} parent=0 // pred_check_branch
    %17 = sbr.rel (0) target = $region17
  $region16: #{forward.2} parent=0 // pred_region
    _
  $region17: #{forward.2} parent=0 // pred_fallthru
    _
  // Predicated region
  $region18: #{forward.2} parent=0 // pred_check
    _
  $region19: #{forward.2} parent=0 // pred_check_branch
    %19 = sbr.rel (0) target = $region21
  $region20: #{forward.2} parent=0 // pred_region
    _
  $region21: #{forward.2} parent=0 // pred_fallthru
    _
  %p20 = scmp.eq.s32.totalorder 0, 0
  // Predicated region
  $region22: #{forward.2} parent=0 // pred_check
    %p21 = pneg %p20
  $region23: #{forward.2} parent=0 // pred_check_branch
    %23 = sbr.rel (%p21) target = $region25
  $region24: #{forward.2} parent=0 // pred_region
    %v24 = vld [vmem:[%s0] sm:$0xff]
    %v25 = vld [vmem:[%s1] sm:$0xf]
    %v26 = vld [vmem:[%s1 + $0x4] sm:$0xf]
    %v27 = vld [vmem:[%s1 + $0x8] sm:$0xf]
    %v28 = vld [vmem:[%s1 + $0xc] sm:$0xf]
    %v29 = vld [vmem:[%s1 + $0x10] sm:$0xf]
    %v30 = vld [vmem:[%s1 + $0x14] sm:$0xf]
    %v31 = vld [vmem:[%s1 + $0x18] sm:$0xf]
    %v32 = vld [vmem:[%s1 + $0x1c] sm:$0xf]
    %v33 = vld [vmem:[%s1 + $0x20] sm:$0xf]
    %v34 = vld [vmem:[%s1 + $0x24] sm:$0xf]
    %v35 = vld [vmem:[%s1 + $0x28] sm:$0xf]
    %v36 = vld [vmem:[%s1 + $0x2c] sm:$0xf]
    %v37 = vld [vmem:[%s1 + $0x30] sm:$0xf]
    %v38 = vld [vmem:[%s1 + $0x34] sm:$0xf]
    %v39 = vld [vmem:[%s1 + $0x38] sm:$0xf]
    %v40 = vld [vmem:[%s1 + $0x3c] sm:$0xf]
    %v41 = vld [vmem:[%s1 + $0x40] sm:$0xf]
    %v42 = vld [vmem:[%s1 + $0x44] sm:$0xf]
    %v43 = vld [vmem:[%s1 + $0x48] sm:$0xf]
    %v44 = vld [vmem:[%s1 + $0x4c] sm:$0xf]
    %v45 = vld [vmem:[%s1 + $0x50] sm:$0xf]
    %v46 = vld [vmem:[%s1 + $0x54] sm:$0xf]
    %v47 = vld [vmem:[%s1 + $0x58] sm:$0xf]
    %v48 = vld [vmem:[%s1 + $0x5c] sm:$0xf]
    %v49 = vld [vmem:[%s1 + $0x60] sm:$0xf]
    %v50 = vld [vmem:[%s1 + $0x64] sm:$0xf]
    %v51 = vld [vmem:[%s1 + $0x68] sm:$0xf]
    %v52 = vld [vmem:[%s1 + $0x6c] sm:$0xf]
    %v53 = vld [vmem:[%s1 + $0x70] sm:$0xf]
    %v54 = vld [vmem:[%s1 + $0x74] sm:$0xf]
    %v55 = vld [vmem:[%s1 + $0x78] sm:$0xf]
    %v56 = vld [vmem:[%s1 + $0x7c] sm:$0xf]
    %v57 = vld [vmem:[%s2] sm:$0x1]
    %v59 = vperm.slane %v57, 0
    %v62 = vunpack.c.l.b16 %v24
    %v63 = vunpack.c.h.b16 %v24
    %v64 = vpack.c.b16 %v62, %v62
    %v65 = vpack.c.b16 %v63, %v63
    %v100 = vunpack.c.l.b16 %v25
    %v101 = vunpack.c.l.b16 %v26
    %v102 = vunpack.c.l.b16 %v27
    %v103 = vunpack.c.l.b16 %v28
    %v104 = vunpack.c.l.b16 %v29
    %v105 = vunpack.c.l.b16 %v30
    %v106 = vunpack.c.l.b16 %v31
    %v107 = vunpack.c.l.b16 %v32
    %v108 = vunpack.c.l.b16 %v33
    %v109 = vunpack.c.l.b16 %v34
    %v110 = vunpack.c.l.b16 %v35
    %v111 = vunpack.c.l.b16 %v36
    %v112 = vunpack.c.l.b16 %v37
    %v113 = vunpack.c.l.b16 %v38
    %v114 = vunpack.c.l.b16 %v39
    %v115 = vunpack.c.l.b16 %v40
    %v116 = vunpack.c.l.b16 %v41
    %v117 = vunpack.c.l.b16 %v42
    %v118 = vunpack.c.l.b16 %v43
    %v119 = vunpack.c.l.b16 %v44
    %v120 = vunpack.c.l.b16 %v45
    %v121 = vunpack.c.l.b16 %v46
    %v122 = vunpack.c.l.b16 %v47
    %v123 = vunpack.c.l.b16 %v48
    %v124 = vunpack.c.l.b16 %v49
    %v125 = vunpack.c.l.b16 %v50
    %v126 = vunpack.c.l.b16 %v51
    %v127 = vunpack.c.l.b16 %v52
    %v128 = vunpack.c.l.b16 %v53
    %v129 = vunpack.c.l.b16 %v54
    %v130 = vunpack.c.l.b16 %v55
    %v131 = vunpack.c.l.b16 %v56
    %v132 = vpack.c.b16 %v101, %v100
    %v133 = vpack.c.b16 %v103, %v102
    %v134 = vpack.c.b16 %v105, %v104
    %v135 = vpack.c.b16 %v107, %v106
    %v136 = vpack.c.b16 %v109, %v108
    %v137 = vpack.c.b16 %v111, %v110
    %v138 = vpack.c.b16 %v113, %v112
    %v139 = vpack.c.b16 %v115, %v114
    %v140 = vpack.c.b16 %v117, %v116
    %v141 = vpack.c.b16 %v119, %v118
    %v142 = vpack.c.b16 %v121, %v120
    %v143 = vpack.c.b16 %v123, %v122
    %v144 = vpack.c.b16 %v125, %v124
    %v145 = vpack.c.b16 %v127, %v126
    %v146 = vpack.c.b16 %v129, %v128
    %v147 = vpack.c.b16 %v131, %v130
    %164 = vmatpush.bf16.msra.mxu0 %v139
    %165 = vmatpush.bf16.msra.mxu0 %v138
    %166 = vmatpush.bf16.msra.mxu0 %v137
    %167 = vmatpush.bf16.msra.mxu0 %v136
    %168 = vmatpush.bf16.msra.mxu0 %v135
    %169 = vmatpush.bf16.msra.mxu0 %v134
    %170 = vmatpush.bf16.msra.mxu0 %v133
    %171 = vmatpush.bf16.msra.mxu0 %v132
    %172 = vmatmul.bf16.gmra.mxu0 %v64
    %v173 = vpop.f32.mrf.mxu0
    %v174 = vadd.f32 %v59, %v173
    %v175 = vpop.f32.mrf.mxu0
    %176 = vdwg.mxu0
    %177 = vmatpush.bf16.msra.mxu0 %v147
    %178 = vmatpush.bf16.msra.mxu0 %v146
    %179 = vmatpush.bf16.msra.mxu0 %v145
    %180 = vmatpush.bf16.msra.mxu0 %v144
    %181 = vmatpush.bf16.msra.mxu0 %v143
    %182 = vmatpush.bf16.msra.mxu0 %v142
    %183 = vmatpush.bf16.msra.mxu0 %v141
    %184 = vmatpush.bf16.msra.mxu0 %v140
    %185 = vmatmul.bf16.gmra.mxu0 %v65
    %v186 = vpop.f32.mrf.mxu0
    %v187 = vadd.f32 %v174, %v186
    %v188 = vpop.f32.mrf.mxu0
    %189 = vdwg.mxu0
    %v190 = vpack.c.bf16 %v187, %v187
    %191 = vst [vmem:[#allocation2] sm:$0xf] %v190
  $region25: #{forward.2} parent=0 // pred_fallthru
    _
  %v192 = vld [vmem:[#allocation2] sm:$0xf]
  %v193 = vld [vmem:[%s3] sm:$0xf]
  %v194 = vld [vmem:[%s3 + $0x4] sm:$0xf]
  %v195 = vld [vmem:[%s3 + $0x8] sm:$0xf]
  %v196 = vld [vmem:[%s3 + $0xc] sm:$0xf]
  %v197 = vld [vmem:[%s3 + $0x10] sm:$0xf]
  %v198 = vld [vmem:[%s3 + $0x14] sm:$0xf]
  %v199 = vld [vmem:[%s3 + $0x18] sm:$0xf]
  %v200 = vld [vmem:[%s3 + $0x1c] sm:$0xf]
  %v201 = vld [vmem:[%s3 + $0x20] sm:$0xf]
  %v202 = vld [vmem:[%s3 + $0x24] sm:$0xf]
  %v203 = vld [vmem:[%s3 + $0x28] sm:$0xf]
  %v204 = vld [vmem:[%s3 + $0x2c] sm:$0xf]
  %v205 = vld [vmem:[%s3 + $0x30] sm:$0xf]
  %v206 = vld [vmem:[%s3 + $0x34] sm:$0xf]
  %v207 = vld [vmem:[%s3 + $0x38] sm:$0xf]
  %v208 = vld [vmem:[%s3 + $0x3c] sm:$0xf]
  %v209 = vld [vmem:[%s4] sm:$0x1]
  %v211 = vperm.slane %v209, 0
  %v229 = vunpack.c.l.b16 %v193
  %v230 = vunpack.c.l.b16 %v194
  %v231 = vunpack.c.l.b16 %v195
  %v232 = vunpack.c.l.b16 %v196
  %v233 = vunpack.c.l.b16 %v197
  %v234 = vunpack.c.l.b16 %v198
  %v235 = vunpack.c.l.b16 %v199
  %v236 = vunpack.c.l.b16 %v200
  %v237 = vunpack.c.l.b16 %v201
  %v238 = vunpack.c.l.b16 %v202
  %v239 = vunpack.c.l.b16 %v203
  %v240 = vunpack.c.l.b16 %v204
  %v241 = vunpack.c.l.b16 %v205
  %v242 = vunpack.c.l.b16 %v206
  %v243 = vunpack.c.l.b16 %v207
  %v244 = vunpack.c.l.b16 %v208
  %v245 = vpack.c.b16 %v230, %v229
  %v246 = vpack.c.b16 %v232, %v231
  %v247 = vpack.c.b16 %v234, %v233
  %v248 = vpack.c.b16 %v236, %v235
  %v249 = vpack.c.b16 %v238, %v237
  %v250 = vpack.c.b16 %v240, %v239
  %v251 = vpack.c.b16 %v242, %v241
  %v252 = vpack.c.b16 %v244, %v243
  %261 = vmatpush.bf16.msra.mxu0 %v252
  %262 = vmatpush.bf16.msra.mxu0 %v251
  %263 = vmatpush.bf16.msra.mxu0 %v250
  %264 = vmatpush.bf16.msra.mxu0 %v249
  %265 = vmatpush.bf16.msra.mxu0 %v248
  %266 = vmatpush.bf16.msra.mxu0 %v247
  %267 = vmatpush.bf16.msra.mxu0 %v246
  %268 = vmatpush.bf16.msra.mxu0 %v245
  %269 = vmatmul.bf16.gmra.mxu0 %v192
  %v270 = vpop.f32.mrf.mxu0
  %v271 = vadd.f32 %v211, %v270
  %v272 = vpop.f32.mrf.mxu0
  %273 = vdwg.mxu0
  %v274 = vmul.f32 %v271, %v271
  %v275 = vmul.f32 %v271, %v274
  %v276 = vmul.f32 %v275, 0.044715
  %v277 = vadd.f32 %v271, %v276
  %v278 = vmul.f32 %v277, 0.7978846
  %v279 = vtanh.pop %v278
  %v280 = vadd.f32 %v279, 1.0
  %v281 = vmul.f32 %v280, 0.5
  %v282 = vmul.f32 %v271, %v281
  %v283 = vpack.c.bf16 %v282, %v282
  %284 = vst [vmem:[%s5] sm:$0xf] %v283
  // Predicated region
  $region26: #{forward.2} parent=0 // pred_check
    _
  $region27: #{forward.2} parent=0 // pred_check_branch
    %286 = sbr.rel (0) target = $region29
  $region28: #{forward.2} parent=0 // pred_region
    _
  $region29: #{forward.2} parent=0 // pred_fallthru
    _
  // Predicated region
  $region30: #{forward.2} parent=0 // pred_check
    _
  $region31: #{forward.2} parent=0 // pred_check_branch
    %288 = sbr.rel (0) target = $region33
  $region32: #{forward.2} parent=0 // pred_region
    _
  $region33: #{forward.2} parent=0 // pred_fallthru
    _

</llo_original>
